<compile_context>
chip_gen: v7x
topology: tpu7x:2x2x1
jax: 0.10.0
libtpu: 0.0.40
codegen_flags: <defaults>
</compile_context>

<pallas_src>
import math

import jax
import jax.numpy as jnp
from jax.experimental import pallas as pl
from jax.experimental.pallas import tpu as pltpu


# ---------------------------------------------------------------------------
# torch.split chunking semantics (int split_size or explicit section list)
# ---------------------------------------------------------------------------
def _chunk_starts_sizes(dim_size, split_size_or_sections):
    if isinstance(split_size_or_sections, (list, tuple)):
        sizes = tuple(int(s) for s in split_size_or_sections)
        assert sum(sizes) == dim_size, "split sections must sum to the dim size"
    else:
        split_size = int(split_size_or_sections)
        sizes, start = [], 0
        while start < dim_size:
            sizes.append(min(split_size, dim_size - start))
            start += sizes[-1]
        sizes = tuple(sizes)
    out, s = [], 0
    for z in sizes:
        out.append((s, z))
        s += z
    return tuple(out)


def _round_up(x, m):
    return -(-x // m) * m


def _sublane_multiple(itemsize):
    # f32 -> 8, bf16 -> 16, int8/fp8 -> 32 sublanes per native VMEM tile.
    return max(8, 32 // max(int(itemsize), 1))


def _vmem_plan():
    """(tile_budget_bytes, vmem_limit_bytes) per TPU generation."""
    try:
        kind = jax.devices()[0].device_kind.lower()
    except Exception:
        kind = ""
    if "v5 lite" in kind or "v5e" in kind or "v5lite" in kind:
        # v5e: ~0.82 TB/s HBM, per-step overhead is a smaller fraction; keep
        # the (padding-aware) budget moderate, raise the 16 MiB scoped default.
        return 12 << 20, 48 << 20
    if "v6" in kind or "trillium" in kind:
        # v6e: 128 MiB VMEM; raise past the 32 MiB scoped default.
        return 40 << 20, 96 << 20
    if "v7" in kind:
        # v7x: only 64 MiB VMEM per TC; keep double-buffer headroom.
        return 24 << 20, 48 << 20
    return 16 << 20, 48 << 20


# ---------------------------------------------------------------------------
# Kernels
# ---------------------------------------------------------------------------
def _make_mid_split_kernel(starts_sizes):
    """Input block (bp, D, t); output i is a static slice along the split axis."""

    def kernel(x_ref, *out_refs):
        for (start, size), o_ref in zip(starts_sizes, out_refs):
            o_ref[...] = x_ref[:, pl.ds(start, size), :]

    return kernel


def _make_lane_split_kernel(starts_sizes):
    """Last-dim split: input block (bp, D), chunks are lane-axis slices."""

    def kernel(x_ref, *out_refs):
        for (start, size), o_ref in zip(starts_sizes, out_refs):
            o_ref[...] = x_ref[:, pl.ds(start, size)]

    return kernel


# ---------------------------------------------------------------------------
# Tile selection (sublane/lane-padding aware, double-buffered footprint)
# ---------------------------------------------------------------------------
def _choose_mid_tiles(prefix, dim_size, suffix, sizes, itemsize, budget):
    """Returns (bp, t) or None if even the smallest legal block blows the budget."""
    sub = _sublane_multiple(itemsize)
    # Second-minor extents pad to the sublane multiple in VMEM.
    rows = _round_up(dim_size, sub) + sum(_round_up(z, sub) for z in sizes)

    def step_bytes(bp, t):
        # 2x: BlockSpec double-buffers the input block and every output block.
        return 2 * bp * rows * _round_up(t, 128) * itemsize

    # Prefer the full lane extent -> fully contiguous HBM write-back per chunk.
    t = suffix
    bp = budget // max(step_bytes(1, t), 1)
    if bp >= 1:
        bp = min(int(bp), prefix)
    else:
        # One prefix row at full suffix does not fit: tile lanes in 128-multiples.
        t = (budget // max(2 * rows * itemsize, 1)) // 128 * 128
        if t < 128:
            return None  # even the smallest legal block is too big -> fall back
        t = min(int(t), suffix)
        bp = 1

    # Megacore: keep >= 2 grid steps so both TensorCores (v7x) share the copy.
    if pl.cdiv(prefix, bp) * pl.cdiv(suffix, t) < 2:
        if prefix >= 2:
            bp = pl.cdiv(prefix, 2)
        elif suffix >= 256 and t == suffix:
            t = _round_up(pl.cdiv(suffix, 2), 128)
    return int(bp), int(t)


def _choose_lane_tiles(prefix, dim_size, sizes, itemsize, budget):
    """Returns bp for the last-dim (lane-split) path, or None to fall back."""
    sub = _sublane_multiple(itemsize)
    lanes = _round_up(dim_size, 128) + sum(_round_up(z, 128) for z in sizes)
    per_row = 2 * lanes * itemsize  # double-buffered in + all outs, per sublane row
    bp = budget // max(per_row, 1)
    if bp < 1:
        return None
    if bp >= prefix or prefix <= sub:
        bp = prefix  # full extent is always a legal block shape
    else:
        bp = min(prefix, max(sub, (int(bp) // sub) * sub))
    # Megacore: keep >= 2 grid steps when there is enough prefix to share.
    if pl.cdiv(prefix, bp) < 2 and prefix >= 2 * sub:
        bp = _round_up(pl.cdiv(prefix, 2), sub)
    return int(bp)


# ---------------------------------------------------------------------------
# Public wrapper: Pallas equivalent of torch.split(x, split_size, dim)
# ---------------------------------------------------------------------------
def split_pallas(x, split_size, dim, *, force_pallas=False):
    ndim = x.ndim
    dim = dim % ndim
    dim_size = x.shape[dim]
    starts_sizes = _chunk_starts_sizes(dim_size, split_size)
    sizes = tuple(z for _, z in starts_sizes)
    itemsize = jnp.dtype(x.dtype).itemsize

    def _lax_split():
        return tuple(
            jax.lax.slice_in_dim(x, s, s + z, axis=dim) for s, z in starts_sizes
        )

    # Small tensors: XLA slicing is zero-copy / fusable into consumers; a
    # pallas_call only adds launch + HBM round-trip overhead.
    if not force_pallas and x.size * itemsize < (1 << 20):
        return _lax_split()

    budget, vmem_limit = _vmem_plan()

    # ---- last-dim split: put the split axis on lanes (no lane-extent-1) ----
    if dim == ndim - 1:
        prefix = math.prod(x.shape[:dim]) if dim > 0 else 1
        x2 = x.reshape(prefix, dim_size)
        bp = _choose_lane_tiles(prefix, dim_size, sizes, itemsize, budget)
        if bp is None:
            return _lax_split()
        grid = (pl.cdiv(prefix, bp),)
        in_spec = pl.BlockSpec((bp, dim_size), lambda p: (p, 0))
        out_specs = tuple(pl.BlockSpec((bp, z), lambda p: (p, 0)) for z in sizes)
        out_shapes = tuple(
            jax.ShapeDtypeStruct((prefix, z), x.dtype) for z in sizes
        )
        outs2 = pl.pallas_call(
            _make_lane_split_kernel(starts_sizes),
            grid=grid,
            in_specs=[in_spec],
            out_specs=out_specs,
            out_shape=out_shapes,
            compiler_params=pltpu.CompilerParams(
                dimension_semantics=("parallel",),
                vmem_limit_bytes=vmem_limit,
            ),
        )(x2)
        return tuple(
            o.reshape(x.shape[:dim] + (z,)) for z, o in zip(sizes, outs2)
        )

    # ---- general path: canonicalize to (prefix, split_dim, lanes) ----
    prefix = math.prod(x.shape[:dim]) if dim > 0 else 1
    suffix = math.prod(x.shape[dim + 1:])
    x3 = x.reshape(prefix, dim_size, suffix)

    tiles = _choose_mid_tiles(prefix, dim_size, suffix, sizes, itemsize, budget)
    if tiles is None:
        # TODO(synk): chunk grid axis / HBM->HBM DMA path for huge split dims.
        return _lax_split()
    bp, t = tiles
    grid = (pl.cdiv(prefix, bp), pl.cdiv(suffix, t))

    in_spec = pl.BlockSpec((bp, dim_size, t), lambda p, l: (p, 0, l))
    out_specs = tuple(
        pl.BlockSpec((bp, z, t), lambda p, l: (p, 0, l)) for z in sizes
    )
    out_shapes = tuple(
        jax.ShapeDtypeStruct((prefix, z, suffix), x.dtype) for z in sizes
    )

    outs3 = pl.pallas_call(
        _make_mid_split_kernel(starts_sizes),
        grid=grid,
        in_specs=[in_spec],
        out_specs=out_specs,
        out_shape=out_shapes,
        compiler_params=pltpu.CompilerParams(
            dimension_semantics=("parallel", "parallel"),
            vmem_limit_bytes=vmem_limit,
        ),
    )(x3)

    outs = []
    for z, o in zip(sizes, outs3):
        shp = list(x.shape)
        shp[dim] = z
        outs.append(o.reshape(tuple(shp)))
    return tuple(outs)


def _reference_split(x, split_size, dim):
    dim = dim % x.ndim
    return tuple(
        jax.lax.slice_in_dim(x, s, s + z, axis=dim)
        for s, z in _chunk_starts_sizes(x.shape[dim], split_size)
    )


if __name__ == "__main__":
    key = jax.random.PRNGKey(0)
    # NCHW input, as the module would receive from a conv stack.
    x = jax.random.normal(key, (2, 4, 16, 16), dtype=jnp.float32)

    # --- even split along channels (dim=1) ---
    outs = jax.block_until_ready(split_pallas(x, 2, 1, force_pallas=True))
    refs = _reference_split(x, 2, 1)
    assert len(outs) == len(refs)
    for o, r in zip(outs, refs):
        assert o.shape == r.shape and o.dtype == r.dtype
        assert bool(jnp.all(o == r))

    # --- uneven split (ragged last chunk, like torch.split) ---
    outs2 = jax.block_until_ready(split_pallas(x, 3, 1, force_pallas=True))
    refs2 = _reference_split(x, 3, 1)
    assert outs2[0].shape == (2, 3, 16, 16) and outs2[1].shape == (2, 1, 16, 16)
    for o, r in zip(outs2, refs2):
        assert bool(jnp.all(o == r))

    # --- split along a spatial dim (dim=2): general canonicalization ---
    outs3 = jax.block_until_ready(split_pallas(x, 8, 2, force_pallas=True))
    refs3 = _reference_split(x, 8, 2)
    for o, r in zip(outs3, refs3):
        assert o.shape == r.shape and bool(jnp.all(o == r))

    # --- split along the LAST dim (dim=-1): lane-split path ---
    outs4 = jax.block_until_ready(split_pallas(x, 8, -1, force_pallas=True))
    refs4 = _reference_split(x, 8, -1)
    for o, r in zip(outs4, refs4):
        assert o.shape == r.shape and bool(jnp.all(o == r))

    # --- bf16 input exercises packing-aware tile budgeting ---
    xb = x.astype(jnp.bfloat16)
    outs5 = jax.block_until_ready(split_pallas(xb, 2, 1, force_pallas=True))
    refs5 = _reference_split(xb, 2, 1)
    for o, r in zip(outs5, refs5):
        assert o.dtype == jnp.bfloat16 and bool(jnp.all(o == r))

    # --- small-tensor fast path (no Pallas) still matches ---
    outs6 = jax.block_until_ready(split_pallas(x, 2, 1))
    for o, r in zip(outs6, refs):
        assert bool(jnp.all(o == r))

    print("KERNEL_OK")
</pallas_src>

<mosaic_0001>
module attributes {stable_mosaic.version = 11 : i64} {
  func.func @kernel(%arg0: i32, %arg1: i32, %arg2: memref<1x4x256xf32, #tpu.memory_space<vmem>>, %arg3: memref<1x2x256xf32, #tpu.memory_space<vmem>>, %arg4: memref<1x2x256xf32, #tpu.memory_space<vmem>>) attributes {dimension_semantics = [#tpu.dimension_semantics<parallel>, #tpu.dimension_semantics<parallel>], iteration_bounds = array<i64: 2, 1>, scalar_prefetch = 0 : i64, scratch_operands = 0 : i64, tpu.core_type = #tpu.core_type<tc>, window_params = [{transform_indices = @transform_0, window_bounds = array<i64: 1, 4, 256>}, {transform_indices = @transform_1, window_bounds = array<i64: 1, 2, 256>}, {transform_indices = @transform_2, window_bounds = array<i64: 1, 2, 256>}]} {
    %c0 = arith.constant 0 : index
    %c0_0 = arith.constant 0 : index
    %c0_1 = arith.constant 0 : index
    %0 = vector.load %arg2[%c0, %c0_0, %c0_1] : memref<1x4x256xf32, #tpu.memory_space<vmem>>, vector<1x2x256xf32>
    %c0_2 = arith.constant 0 : index
    %c0_3 = arith.constant 0 : index
    %c0_4 = arith.constant 0 : index
    %1 = vector.load %arg3[%c0_2, %c0_3, %c0_4] : memref<1x2x256xf32, #tpu.memory_space<vmem>>, vector<1x2x256xf32>
    tpu.vector_store %arg3[%c0_2, %c0_3, %c0_4], %0 {strides = array<i32>} : memref<1x2x256xf32, #tpu.memory_space<vmem>>, vector<1x2x256xf32>,
    %c0_5 = arith.constant 0 : index
    %c2 = arith.constant 2 : index
    %c0_6 = arith.constant 0 : index
    %2 = vector.load %arg2[%c0_5, %c2, %c0_6] : memref<1x4x256xf32, #tpu.memory_space<vmem>>, vector<1x2x256xf32>
    %c0_7 = arith.constant 0 : index
    %c0_8 = arith.constant 0 : index
    %c0_9 = arith.constant 0 : index
    %3 = vector.load %arg4[%c0_7, %c0_8, %c0_9] : memref<1x2x256xf32, #tpu.memory_space<vmem>>, vector<1x2x256xf32>
    tpu.vector_store %arg4[%c0_7, %c0_8, %c0_9], %2 {strides = array<i32>} : memref<1x2x256xf32, #tpu.memory_space<vmem>>, vector<1x2x256xf32>,
    return
  }
  func.func @transform_0(%arg0: i32, %arg1: i32) -> (i32, i32, i32) {
    %c0_i32 = arith.constant 0 : i32
    %c0_i32_0 = arith.constant 0 : i32
    return %arg0, %c0_i32, %arg1 : i32, i32, i32
  }
  func.func @transform_1(%arg0: i32, %arg1: i32) -> (i32, i32, i32) {
    %c0_i32 = arith.constant 0 : i32
    %c0_i32_0 = arith.constant 0 : i32
    return %arg0, %c0_i32, %arg1 : i32, i32, i32
  }
  func.func @transform_2(%arg0: i32, %arg1: i32) -> (i32, i32, i32) {
    %c0_i32 = arith.constant 0 : i32
    %c0_i32_0 = arith.constant 0 : i32
    return %arg0, %c0_i32, %arg1 : i32, i32, i32
  }
}

</mosaic_0001>

<llo_original>
// kernel: tpu_custom_call.1
$region0: #{tpu_custom_call.1}
  #allocation0 [shape = 'u32[]', space=smem, size = 0x4, offset = 0x4, fixed_abs, tag = 'smem constant byte address 0x4 - core index']
  #allocation1 [shape = 'u32[144,128]{1,0:T(1,128)}', space=vmem, size = 0x12000, scoped, tag = 'internal scratch']
  %s0 = inlined_call_operand.hbm [shape: f32[2,4,256], index: 0, kind: input, shape index: {}]
  %s1 = inlined_call_operand.hbm [shape: f32[2,2,256], index: 1, kind: output, shape index: {0}]
  %s2 = inlined_call_operand.hbm [shape: f32[2,2,256], index: 2, kind: output, shape index: {1}]
  %3 = xla_tuple %s1, %s2
  %s4 = sld [smem:[#allocation0]]
  $region49: #{tpu_custom_call.1} parent=0
    _
  %s6 = ssub.s32 1, %s4
  %s7 = scalar_select 0, %s6, %s4
  $region1: #{tpu_custom_call.1} parent=0
    #allocation2 [shape = 'u8[8192]{0}', space=vmem, size = 0x2000, scoped, tag = 'input window, operand 0']
    #allocation3 [shape = 's32[2]{0}', space=sflag, size = 0x8, scoped, tag = 'scoped memory for tpu_custom_call.1']
    #allocation4 [shape = 's32[2]{0}', space=sflag, size = 0x8, scoped, tag = 'scoped memory for tpu_custom_call.1']
    #allocation5 [shape = 'u8[4096]{0}', space=vmem, size = 0x1000, scoped, tag = 'output window, operand 0']
    #allocation6 [shape = 'u8[4096]{0}', space=vmem, size = 0x1000, scoped, tag = 'output window, operand 1']
    #allocation7 [shape = 's32[2]{0}', space=sflag, size = 0x8, scoped, tag = 'scoped memory for tpu_custom_call.1']
    %8 = vsyncpa [#allocation3], 0
    %s9 = scalar_lea.sflag [#allocation3], 1
    %10 = vsyncpa %s9, 0
    %11 = vsyncpa [#allocation4], 0
    %s12 = scalar_lea.sflag [#allocation4], 1
    %13 = vsyncpa %s12, 0
    %14 = vsyncpa [#allocation7], 0
    %s15 = scalar_lea.sflag [#allocation7], 1
    %16 = vsyncpa %s15, 0
    loop: start=0, step=1, limit=4
    $region2: #{tpu_custom_call.1} parent=1 // loop_pre_header
      _
    $region3: #{tpu_custom_call.1} parent=1 // loop_header
      %s18 = sphi 0, %s22
      %p19 = scmp.ge.s32.totalorder %s18, 4
      %s25 = sphi 0, %s37
      %s26 = sphi 0, %s33
      %s27 = sphi 0, %s25
      %s28 = sphi 0, %s26
      %s29 = sphi 0, %s27
      %s30 = sphi 0, %s28
      %s42 = sphi 0, %s44
      %s45 = sphi 0, %s42
      %s46 = sphi 0, %s45
      %s62 = sphi 0, %s46
      %s70 = sphi 0, %s72
      %s73 = sphi 0, %s70
      %s74 = sphi 0, %s73
      %s90 = sphi 0, %s74
      %s98 = sphi 0, %s100
      %s101 = sphi 0, %s98
      %s102 = sphi 0, %s101
      %s118 = sphi 0, %s102
    $region4: #{tpu_custom_call.1} parent=1 // loop_header_branch
      %21 = sbr.rel (%p19) target = $region8
    $region5: #{tpu_custom_call.1} parent=1 // loop_body
      %s23 = ssub.s32 %s18, 1
      %s24 = ssub.s32 %s18, 2
      %s31 = sadd.s32 1, %s26
      %p32 = scmp.ge.s32.totalorder %s31, 1
      %s33 = scalar_select %p32, 0, %s31
      %s34 = sadd.s32 1, %s25
      %s35 = scalar_select %p32, %s34, %s25
      %p36 = scmp.ge.s32.totalorder %s35, 2
      %s37 = scalar_select %p36, 0, %s35
      %s38 = ssub.s32 %s25, %s37
      %s39 = ssub.s32 %s26, %s33
      %s40 = sor.u32 %s38, %s39
      %p41 = scmp.eq.s32.totalorder %s40, 0
      %s43 = sadd.s32 %s42, 1
      %s44 = scalar_select %p41, %s42, %s43
      %p47 = pneg %p41
      %p48 = scmp.eq.s32.totalorder %s18, 1
      %p49 = por %p47, %p48
      %p50 = scmp.ne.s32.totalorder %s42, %s45
      %p51 = scmp.eq.s32.totalorder %s18, 0
      %p52 = por %p50, %p51
      %p53 = scmp.ne.s32.totalorder %s42, %s45
      %p54 = scmp.eq.s32.totalorder %s23, 1
      %p55 = por %p53, %p54
      %p56 = scmp.ne.s32.totalorder %s45, %s46
      %p57 = scmp.eq.s32.totalorder %s23, 0
      %p58 = por %p56, %p57
      %p59 = scmp.ne.s32.totalorder %s45, %s46
      %p60 = scmp.eq.s32.totalorder %s24, 1
      %p61 = por %p59, %p60
      %p63 = scmp.ne.s32.totalorder %s46, %s62
      %p64 = scmp.eq.s32.totalorder %s24, 0
      %p65 = por %p63, %p64
      %s66 = ssub.s32 %s25, %s37
      %s67 = ssub.s32 %s26, %s33
      %s68 = sor.u32 %s66, %s67
      %p69 = scmp.eq.s32.totalorder %s68, 0
      %s71 = sadd.s32 %s70, 1
      %s72 = scalar_select %p69, %s70, %s71
      %p75 = pneg %p69
      %p76 = scmp.eq.s32.totalorder %s18, 1
      %p77 = por %p75, %p76
      %p78 = scmp.ne.s32.totalorder %s70, %s73
      %p79 = scmp.eq.s32.totalorder %s18, 0
      %p80 = por %p78, %p79
      %p81 = scmp.ne.s32.totalorder %s70, %s73
      %p82 = scmp.eq.s32.totalorder %s23, 1
      %p83 = por %p81, %p82
      %p84 = scmp.ne.s32.totalorder %s73, %s74
      %p85 = scmp.eq.s32.totalorder %s23, 0
      %p86 = por %p84, %p85
      %p87 = scmp.ne.s32.totalorder %s73, %s74
      %p88 = scmp.eq.s32.totalorder %s24, 1
      %p89 = por %p87, %p88
      %p91 = scmp.ne.s32.totalorder %s74, %s90
      %p92 = scmp.eq.s32.totalorder %s24, 0
      %p93 = por %p91, %p92
      %s94 = ssub.s32 %s25, %s37
      %s95 = ssub.s32 %s26, %s33
      %s96 = sor.u32 %s94, %s95
      %p97 = scmp.eq.s32.totalorder %s96, 0
      %s99 = sadd.s32 %s98, 1
      %s100 = scalar_select %p97, %s98, %s99
      %p103 = pneg %p97
      %p104 = scmp.eq.s32.totalorder %s18, 1
      %p105 = por %p103, %p104
      %p106 = scmp.ne.s32.totalorder %s98, %s101
      %p107 = scmp.eq.s32.totalorder %s18, 0
      %p108 = por %p106, %p107
      %p109 = scmp.ne.s32.totalorder %s98, %s101
      %p110 = scmp.eq.s32.totalorder %s23, 1
      %p111 = por %p109, %p110
      %p112 = scmp.ne.s32.totalorder %s101, %s102
      %p113 = scmp.eq.s32.totalorder %s23, 0
      %p114 = por %p112, %p113
      %p115 = scmp.ne.s32.totalorder %s101, %s102
      %p116 = scmp.eq.s32.totalorder %s24, 1
      %p117 = por %p115, %p116
      %p119 = scmp.ne.s32.totalorder %s102, %s118
      %p120 = scmp.eq.s32.totalorder %s24, 0
      %p121 = por %p119, %p120
      %p122 = scmp.le.s32.totalorder 1, %s18
      %p123 = scmp.lt.s32.totalorder %s18, 3
      %p124 = pnand %p122, %p123
      %p125 = pneg %p124
      // Predicated region
      $region9: #{tpu_custom_call.1} parent=5 // pred_check
        _
      $region10: #{tpu_custom_call.1} parent=5 // pred_check_branch
        %127 = sbr.rel (%p124) target = $region12
      $region11: #{tpu_custom_call.1} parent=5 // pred_region
        %s128 = ssub.s32 %s18, 1
      $region12: #{tpu_custom_call.1} parent=5 // pred_fallthru
        _
      %p129 = scmp.lt.s32.totalorder %s18, 2
      // Predicated region
      $region13: #{tpu_custom_call.1} parent=5 // pred_check
        %p130 = pneg %p129
      $region14: #{tpu_custom_call.1} parent=5 // pred_check_branch
        %132 = sbr.rel (%p130) target = $region16
      $region15: #{tpu_custom_call.1} parent=5 // pred_region
        // Predicated region
        $region17: #{tpu_custom_call.1} parent=15 // pred_check
          %p133 = pneg %p52
        $region18: #{tpu_custom_call.1} parent=15 // pred_check_branch
          %135 = sbr.rel (%p133) target = $region20
        $region19: #{tpu_custom_call.1} parent=15 // pred_region
          %s136 = sand.u32 %s42, 1
          %s137 = scalar_lea.sflag [#allocation3], %s136
          %s138 = sand.u32 %s42, 1
          %s139 = smul.addr %s138, 8
          %s140 = scalar_lea.vmem [#allocation2], %s139
          %s141 = smul.u32 2, %s26
          %s143 = ssub.s32 128, 128
          %144 = vsyncadd %s137, %s143
          %s145 = smul.addr %s25, 2
          %s146 = sadd.s32 %s141, %s145
          %s147 = smul.addr %s146, 64
          %s148 = scalar_lea.hbm %s0, %s147
          %s150 = sshll.u32 %s140, 4
          %s151 = int_to_ptr.vmem [resolvable:$true] %s150
          %153 = dma.hbm_to_vmem [thread:$0]  %s148, 128, %s151, %s137
        $region20: #{tpu_custom_call.1} parent=15 // pred_fallthru
          _
      $region16: #{tpu_custom_call.1} parent=5 // pred_fallthru
        _
      %p154 = scmp.le.s32.totalorder 1, %s18
      %p155 = scmp.lt.s32.totalorder %s18, 3
      %p156 = pnand %p154, %p155
      %p157 = pneg %p156
      // Predicated region
      $region21: #{tpu_custom_call.1} parent=5 // pred_check
        _
      $region22: #{tpu_custom_call.1} parent=5 // pred_check_branch
        %159 = sbr.rel (%p156) target = $region24
      $region23: #{tpu_custom_call.1} parent=5 // pred_region
        %s160 = ssub.s32 %s18, 1
        %s161 = sand.u32 %s45, 1
        %s162 = scalar_lea.sflag [#allocation3], %s161
        %s163 = sand.u32 %s45, 1
        %s164 = smul.addr %s163, 8
        %s165 = scalar_lea.vmem [#allocation2], %s164
        // Predicated region
        $region25: #{tpu_custom_call.1} parent=23 // pred_check
          %p166 = pneg %p58
        $region26: #{tpu_custom_call.1} parent=23 // pred_check_branch
          %168 = sbr.rel (%p166) target = $region28
        $region27: #{tpu_custom_call.1} parent=23 // pred_region
          %169 = dma.done %s162, 128
        $region28: #{tpu_custom_call.1} parent=23 // pred_fallthru
          _
        %s170 = sand.u32 %s45, 1
        %s171 = scalar_lea.sflag [#allocation3], %s170
        %s172 = sand.u32 %s45, 1
        %s173 = smul.addr %s172, 8
        %s174 = scalar_lea.vmem [#allocation2], %s173
        %p175 = pneg %p58
        %p176 = pneg %p55
        %p177 = pneg %p86
        %p178 = pneg %p83
        %s179 = sand.u32 %s73, 1
        %s180 = scalar_lea.sflag [#allocation4], %s179
        %s181 = sand.u32 %s73, 1
        %s182 = smul.addr %s181, 4
        %s183 = scalar_lea.vmem [#allocation5], %s182
        %p184 = pneg %p114
        %p185 = pneg %p111
        %s186 = sand.u32 %s101, 1
        %s187 = scalar_lea.sflag [#allocation7], %s186
        %s188 = sand.u32 %s101, 1
        %s189 = smul.addr %s188, 4
        %s190 = scalar_lea.vmem [#allocation6], %s189
        %s191 = smul.u32 2, %s28
        %s192 = smul.u32 2, %s28
        %s193 = smul.u32 2, %s28
        %v194 = vld [vmem:[%s165] sm:$0x33]
        %v197 = vunpack.c.l.s4 1983009808
        %v198 = vunpack.c.0.s8 %v197
        %v199 = vlaneseq
        %v200 = vshrl.u32 %v199, 7
        %v201 = vsub.s32 %v198, %v200
        %v202 = vrot.slane %v194, %v201
        %204 = vst [vmem:[%s183] sm:$0xf] %v202
        %v205 = vld [vmem:[%s165] sm:$0xcc]
        %v208 = vunpack.c.l.s4 1983009808
        %v209 = vunpack.c.0.s8 %v208
        %v210 = vlaneseq
        %v211 = vshrl.u32 %v210, 7
        %v212 = vsub.s32 %v209, %v211
        %v213 = vrot.slane %v205, %v212
        %v214 = vcombine.high %v213, %v213
        %216 = vst [vmem:[%s190] sm:$0xf] %v214
        %s217 = sand.u32 %s73, 1
        %s218 = scalar_lea.sflag [#allocation4], %s217
        %s219 = sand.u32 %s73, 1
        %s220 = smul.addr %s219, 4
        %s221 = scalar_lea.vmem [#allocation5], %s220
        %s222 = sand.u32 %s101, 1
        %s223 = scalar_lea.sflag [#allocation7], %s222
        %s224 = sand.u32 %s101, 1
        %s225 = smul.addr %s224, 4
        %s226 = scalar_lea.vmem [#allocation6], %s225
        // Predicated region
        $region29: #{tpu_custom_call.1} parent=23 // pred_check
          %p227 = pneg %p83
        $region30: #{tpu_custom_call.1} parent=23 // pred_check_branch
          %229 = sbr.rel (%p227) target = $region32
        $region31: #{tpu_custom_call.1} parent=23 // pred_region
          %s230 = smul.u32 2, %s28
          %s232 = ssub.s32 64, 64
          %233 = vsyncadd %s218, %s232
          %s234 = smul.addr %s27, 2
          %s235 = sadd.s32 %s230, %s234
          %s236 = smul.addr %s235, 32
          %s237 = scalar_lea.hbm %s1, %s236
          %s239 = sshll.u32 %s221, 4
          %s240 = int_to_ptr.vmem [resolvable:$true] %s239
          %242 = dma.vmem_to_hbm [thread:$0]  %s240, 64, %s237, %s218
        $region32: #{tpu_custom_call.1} parent=23 // pred_fallthru
          _
        // Predicated region
        $region33: #{tpu_custom_call.1} parent=23 // pred_check
          %p243 = pneg %p111
        $region34: #{tpu_custom_call.1} parent=23 // pred_check_branch
          %245 = sbr.rel (%p243) target = $region36
        $region35: #{tpu_custom_call.1} parent=23 // pred_region
          %s246 = smul.u32 2, %s28
          %s248 = ssub.s32 64, 64
          %249 = vsyncadd %s223, %s248
          %s250 = smul.addr %s27, 2
          %s251 = sadd.s32 %s246, %s250
          %s252 = smul.addr %s251, 32
          %s253 = scalar_lea.hbm %s2, %s252
          %s255 = sshll.u32 %s226, 4
          %s256 = int_to_ptr.vmem [resolvable:$true] %s255
          %258 = dma.vmem_to_hbm [thread:$0]  %s256, 64, %s253, %s223
        $region36: #{tpu_custom_call.1} parent=23 // pred_fallthru
          _
      $region24: #{tpu_custom_call.1} parent=5 // pred_fallthru
        _
      %p259 = scmp.le.s32.totalorder 2, %s18
      // Predicated region
      $region37: #{tpu_custom_call.1} parent=5 // pred_check
        %p260 = pneg %p259
      $region38: #{tpu_custom_call.1} parent=5 // pred_check_branch
        %262 = sbr.rel (%p260) target = $region40
      $region39: #{tpu_custom_call.1} parent=5 // pred_region
        %s263 = ssub.s32 %s18, 2
        // Predicated region
        $region41: #{tpu_custom_call.1} parent=39 // pred_check
          %p264 = pneg %p89
        $region42: #{tpu_custom_call.1} parent=39 // pred_check_branch
          %266 = sbr.rel (%p264) target = $region44
        $region43: #{tpu_custom_call.1} parent=39 // pred_region
          %s267 = sand.u32 %s74, 1
          %s268 = scalar_lea.sflag [#allocation4], %s267
          %s269 = sand.u32 %s74, 1
          %s270 = smul.addr %s269, 4
          %s271 = scalar_lea.vmem [#allocation5], %s270
          %272 = dma.done %s268, 64
        $region44: #{tpu_custom_call.1} parent=39 // pred_fallthru
          _
        // Predicated region
        $region45: #{tpu_custom_call.1} parent=39 // pred_check
          %p273 = pneg %p117
        $region46: #{tpu_custom_call.1} parent=39 // pred_check_branch
          %275 = sbr.rel (%p273) target = $region48
        $region47: #{tpu_custom_call.1} parent=39 // pred_region
          %s276 = sand.u32 %s102, 1
          %s277 = scalar_lea.sflag [#allocation7], %s276
          %s278 = sand.u32 %s102, 1
          %s279 = smul.addr %s278, 4
          %s280 = scalar_lea.vmem [#allocation6], %s279
          %281 = dma.done %s277, 64
        $region48: #{tpu_custom_call.1} parent=39 // pred_fallthru
          _
      $region40: #{tpu_custom_call.1} parent=5 // pred_fallthru
        _
    $region6: #{tpu_custom_call.1} parent=1 // loop_footer
      %s22 = sadd.s32 1, %s18
    $region7: #{tpu_custom_call.1} parent=1 // loop_footer_branch
      %17 = sbr.rel target = $region3
    $region8: #{tpu_custom_call.1} parent=1 // loop_exit
      _
    %282 = vsyncpa [#allocation3], 1
    %s283 = scalar_lea.sflag [#allocation3], 1
    %284 = vsyncpa %s283, 1
    %285 = vsyncpa [#allocation4], 1
    %s286 = scalar_lea.sflag [#allocation4], 1
    %287 = vsyncpa %s286, 1
    %288 = vsyncpa [#allocation7], 1
    %s289 = scalar_lea.sflag [#allocation7], 1
    %290 = vsyncpa %s289, 1

</llo_original>
